<compile_context>
chip_gen: v7x
topology: tpu7x:2x2x1
jax: 0.10.0
libtpu: 0.0.40
codegen_flags: <defaults>
</compile_context>

<pallas_src>
import functools

import numpy as np
import jax
import jax.numpy as jnp
from jax import lax
from jax.experimental import pallas as pl
from jax.experimental.pallas import tpu as pltpu

_LANES = 128
_CHUNK = 512            # rows per inner vreg-resident chunk
_MAX_ROW_TILE = 8192    # upper bound on rows per grid tile
_VMEM_BUDGET = 24 << 20 # byte budget for the double-buffered input tiles
_X_PAD = -1.0e4         # logit pad: bce(_X_PAD, 0) == 0 exactly (exp underflow)


def _round_up(n, m):
    return ((n + m - 1) // m) * m


def _blc_bce_kernel(x_ref, t_ref, o_ref, *, chunk):
    """Grid = (NS, num, T): ns/scale axes 'parallel', t 'arbitrary' (reduction).

    x_ref : (1, G, ROW_TILE, 128)  logit tiles for the G preds of this scale
    t_ref : (1, ROW_TILE, 128)     binary target tile (bf16)
    o_ref : (1, 1, 1+2G, 8, 128)   f32 accumulators, resident across t:
            slot 0    : sum(t)      (positive count, shared by all G preds)
            slot 1+2g : sum(bce_g)
            slot 2+2g : sum(t * bce_g)
    """
    @pl.when(pl.program_id(2) == 0)
    def _init():
        o_ref[...] = jnp.zeros_like(o_ref)

    G = x_ref.shape[1]
    row_tile = t_ref.shape[1]
    n_chunks = row_tile // chunk
    groups = chunk // 8

    def fold(v):
        # (chunk, 128) -> (8, 128): pure sublane-group adds (VPU only).
        return jnp.sum(v.reshape(groups, 8, _LANES), axis=0)

    def body(c, accs):
        r0 = pl.multiple_of(c * chunk, chunk)
        t = t_ref[0, pl.ds(r0, chunk), :].astype(jnp.float32)
        out = [accs[0] + fold(t)]
        for g in range(G):
            x = x_ref[0, g, pl.ds(r0, chunk), :].astype(jnp.float32)
            # numerically-stable BCE with logits.
            bce = (jnp.maximum(x, 0.0) - x * t
                   + jnp.log(1.0 + jnp.exp(-jnp.abs(x))))
            out.append(accs[1 + 2 * g] + fold(bce))
            out.append(accs[2 + 2 * g] + fold(t * bce))
        return tuple(out)

    init = tuple(jnp.zeros((8, _LANES), jnp.float32) for _ in range(1 + 2 * G))
    accs = lax.fori_loop(0, n_chunks, body, init, unroll=min(2, n_chunks))
    for i in range(1 + 2 * G):
        o_ref[0, 0, i] += accs[i]


def _fused_partial_sums(x_all, gt_all, *, row_tile, chunk, ns):
    """x_all: (num, G, R, 128) logits; gt_all: (num, R, 128) bf16 targets.

    Returns (NS, num, 1+2G, 8, 128) f32 vector partial sums.
    """
    num, G, R, _ = x_all.shape
    T = R // row_tile
    t_half = T // ns
    n_out = 1 + 2 * G

    x_blk = 2 * G * row_tile * _LANES * x_all.dtype.itemsize     # double-buffered
    t_blk = 2 * row_tile * _LANES * gt_all.dtype.itemsize
    vmem_limit = int(min(60 << 20, x_blk + t_blk + (8 << 20)))

    elems = num * G * R * _LANES
    return pl.pallas_call(
        functools.partial(_blc_bce_kernel, chunk=chunk),
        out_shape=jax.ShapeDtypeStruct((ns, num, n_out, 8, _LANES), jnp.float32),
        grid_spec=pltpu.PrefetchScalarGridSpec(
            num_scalar_prefetch=0,
            grid=(ns, num, t_half),
            in_specs=[
                pl.BlockSpec((1, G, row_tile, _LANES),
                             lambda n, s, t: (s, 0, n * t_half + t, 0)),
                pl.BlockSpec((1, row_tile, _LANES),
                             lambda n, s, t: (s, n * t_half + t, 0)),
            ],
            out_specs=pl.BlockSpec((1, 1, n_out, 8, _LANES),
                                   lambda n, s, t: (n, s, 0, 0, 0)),
        ),
        compiler_params=pltpu.CompilerParams(
            dimension_semantics=("parallel", "parallel", "arbitrary"),
            vmem_limit_bytes=vmem_limit),
        cost_estimate=pl.CostEstimate(
            flops=8 * elems,
            transcendentals=2 * elems,
            bytes_accessed=int(x_all.size * x_all.dtype.itemsize
                               + gt_all.size * gt_all.dtype.itemsize
                               + ns * num * n_out * 8 * _LANES * 4)),
    )(x_all, gt_all)


def blc_bce(scaled_preds, gt):
    """BlcBCE.forward.

    gt: [B, num, C, H, W] binary {0,1} masks (as in the module's intended use);
    scaled_preds: list (len num) of lists of [B, C, H, W] logit maps; the first
    prediction of each inner list is skipped (matches the reference).
    """
    B, num, C, H, W = gt.shape
    N = B * C * H * W

    per_scale = [list(scaled_preds[s][1:]) for s in range(num)]
    counts = [len(ps) for ps in per_scale]
    P = sum(counts)
    if P == 0:
        return jnp.float32(0.0)
    G = max(counts)

    x_dtype = None
    for ps in per_scale:
        if ps:
            x_dtype = jnp.asarray(ps[0]).dtype
            break
    x_itemsize = jnp.dtype(x_dtype).itemsize

    # ---------------- padding-aware, VMEM-budgeted tiling ----------------
    base_rows = pl.cdiv(N, _LANES)
    per_row_bytes = 2 * _LANES * (G * x_itemsize + 2)   # 2-buf x + bf16 gt
    vmem_rows = max(256, (_VMEM_BUDGET // per_row_bytes) // 256 * 256)
    max_rows = min(_MAX_ROW_TILE, vmem_rows)

    T = pl.cdiv(base_rows, max_rows)
    ns = 2 if T >= 2 else 1            # split the t reduction across 2 TCs (v7x)
    T = _round_up(T, ns)
    row_tile = _round_up(pl.cdiv(base_rows, T), 32)      # safe for f32/bf16/int8
    chunk = min(_CHUNK, row_tile)
    row_tile = _round_up(row_tile, chunk)
    R = T * row_tile
    n_pad = R * _LANES - N

    # ---------------- pack inputs (one launch for everything) ----------------
    valid = np.zeros((num, G), dtype=np.float32)
    rows = []
    for s in range(num):
        row = []
        for g in range(G):
            if g < counts[s]:
                row.append(jnp.reshape(per_scale[s][g], (-1,)))
                valid[s, g] = 1.0
            else:                      # dummy slot (unequal preds per scale)
                row.append(jnp.zeros((N,), dtype=x_dtype))
        rows.append(jnp.stack(row))
    x_all = jnp.stack(rows)                                          # (num, G, N)
    # cast fused into the (unavoidable) transpose/reshape copy -> gt bytes / 2
    gt_all = jnp.transpose(gt, (1, 0, 2, 3, 4)).reshape(num, N).astype(jnp.bfloat16)

    if n_pad:
        # targets pad 0, logits pad large-negative  =>  bce == 0, pos == 0
        x_all = jnp.pad(x_all, ((0, 0), (0, 0), (0, n_pad)),
                        constant_values=_X_PAD)
        gt_all = jnp.pad(gt_all, ((0, 0), (0, n_pad)))
    x_all = x_all.reshape(num, G, R, _LANES)
    gt_all = gt_all.reshape(num, R, _LANES)

    acc = _fused_partial_sums(x_all, gt_all, row_tile=row_tile, chunk=chunk, ns=ns)
    sums = jnp.sum(acc, axis=(0, 3, 4))                              # (num, 1+2G)

    n_f = jnp.float32(N)
    num_pos = sums[:, 0]                                             # (num,)
    num_neg = n_f - num_pos          # binary gt: num_pos + num_neg == N
    alpha = num_neg / n_f
    beta = 1.1 * num_pos / n_f
    s_all = sums[:, 1::2]                                            # (num, G)
    s_pos = sums[:, 2::2]                                            # (num, G)
    s_neg = s_all - s_pos
    # weights = alpha*pos + beta*neg  =>  sum(w*bce) = alpha*S_pos + beta*S_neg
    per_pred = (alpha[:, None] * s_pos + beta[:, None] * s_neg) / n_f
    return jnp.sum(per_pred * jnp.asarray(valid))
    # TODO(synk): gt transpose copy could be eliminated with a B grid axis when
    # C*H*W is 128-divisible (review item 11); not done here.


# ----------------------------- plain-JAX reference -----------------------------
def _ref_bce2d(x, t):
    x = x.astype(jnp.float32)
    t = t.astype(jnp.float32)
    pos = (t == 1.0).astype(jnp.float32)
    neg = (t == 0.0).astype(jnp.float32)
    num_pos = pos.sum()
    num_neg = neg.sum()
    tot = num_pos + num_neg
    alpha = num_neg / tot
    beta = 1.1 * num_pos / tot
    w = alpha * pos + beta * neg
    bce = jnp.maximum(x, 0.0) - x * t + jnp.log1p(jnp.exp(-jnp.abs(x)))
    return (w * bce).mean()


def _ref_blc_bce(scaled_preds, gt):
    num = gt.shape[1]
    loss = jnp.float32(0.0)
    for inum in range(num):
        for x in scaled_preds[inum][1:]:
            loss = loss + _ref_bce2d(x, gt[:, inum])
    return loss


if __name__ == "__main__":
    key = jax.random.PRNGKey(0)
    B, NUM, C, H, W = 2, 2, 4, 16, 16
    N_OUTS = 3  # per scale; the first of each inner list is skipped -> 2 used

    k_gt, k_pred = jax.random.split(key)
    # Binary ground truth (values exactly 0.0 / 1.0), NCHW plus a 'num' axis.
    gt = jax.random.bernoulli(k_gt, 0.3, (B, NUM, C, H, W)).astype(jnp.float32)

    pred_keys = jax.random.split(k_pred, NUM * N_OUTS)
    scaled_preds = [
        [
            jax.random.normal(pred_keys[inum * N_OUTS + j], (B, C, H, W),
                              dtype=jnp.float32) * 2.0
            for j in range(N_OUTS)
        ]
        for inum in range(NUM)
    ]

    loss = jax.block_until_ready(blc_bce(scaled_preds, gt))
    ref = jax.block_until_ready(_ref_blc_bce(scaled_preds, gt))
    assert jnp.allclose(loss, ref, rtol=1e-5, atol=1e-5), (loss, ref)

    print("KERNEL_OK")
</pallas_src>

<mosaic_0001>
module attributes {stable_mosaic.version = 11 : i64} {
  func.func @_blc_bce_kernel(%arg0: i32, %arg1: i32, %arg2: i32, %arg3: memref<1x2x32x128xf32, #tpu.memory_space<vmem>>, %arg4: memref<1x32x128xbf16, #tpu.memory_space<vmem>>, %arg5: memref<1x1x5x8x128xf32, #tpu.memory_space<vmem>>) attributes {dimension_semantics = [#tpu.dimension_semantics<parallel>, #tpu.dimension_semantics<parallel>, #tpu.dimension_semantics<arbitrary>], iteration_bounds = array<i64: 1, 2, 1>, scalar_prefetch = 0 : i64, scratch_operands = 0 : i64, tpu.core_type = #tpu.core_type<tc>, window_params = [{transform_indices = @transform_0, window_bounds = array<i64: 1, 2, 32, 128>}, {transform_indices = @transform_1, window_bounds = array<i64: 1, 32, 128>}, {transform_indices = @transform_2, window_bounds = array<i64: 1, 1, 5, 8, 128>}]} {
    %c0_i32 = arith.constant 0 : i32
    %0 = arith.cmpi eq, %arg2, %c0_i32 : i32
    %1 = arith.extui %0 : i1 to i32
    %c0_i32_0 = arith.constant 0 : i32
    %2 = arith.cmpi ne, %1, %c0_i32_0 : i32
    scf.if %2 {
      %cst_70 = arith.constant 0.000000e+00 : f32
      %91 = vector.broadcast %cst_70 : f32 to vector<1x1x5x8x128xf32>
      %c0_71 = arith.constant 0 : index
      %c0_72 = arith.constant 0 : index
      %c0_73 = arith.constant 0 : index
      %c0_74 = arith.constant 0 : index
      %c0_75 = arith.constant 0 : index
      %92 = vector.load %arg5[%c0_71, %c0_72, %c0_73, %c0_74, %c0_75] : memref<1x1x5x8x128xf32, #tpu.memory_space<vmem>>, vector<1x1x5x8x128xf32>
      tpu.vector_store %arg5[%c0_71, %c0_72, %c0_73, %c0_74, %c0_75], %91 {strides = array<i32>} : memref<1x1x5x8x128xf32, #tpu.memory_space<vmem>>, vector<1x1x5x8x128xf32>,
    } else {
    }
    %cst = arith.constant 0.000000e+00 : f32
    %3 = vector.broadcast %cst : f32 to vector<8x128xf32>
    %cst_1 = arith.constant 0.000000e+00 : f32
    %4 = vector.broadcast %cst_1 : f32 to vector<8x128xf32>
    %cst_2 = arith.constant 0.000000e+00 : f32
    %5 = vector.broadcast %cst_2 : f32 to vector<8x128xf32>
    %cst_3 = arith.constant 0.000000e+00 : f32
    %6 = vector.broadcast %cst_3 : f32 to vector<8x128xf32>
    %cst_4 = arith.constant 0.000000e+00 : f32
    %7 = vector.broadcast %cst_4 : f32 to vector<8x128xf32>
    %c0_i32_5 = arith.constant 0 : i32
    %c32_i32 = arith.constant 32 : i32
    %8 = arith.muli %c0_i32_5, %c32_i32 : i32
    %9 = tpu.assume_multiple %8, 32 : i32
    %c0 = arith.constant 0 : index
    %10 = arith.index_cast %9 : i32 to index
    %c0_6 = arith.constant 0 : index
    %11 = vector.load %arg4[%c0, %10, %c0_6] : memref<1x32x128xbf16, #tpu.memory_space<vmem>>, vector<1x32x128xbf16>
    %12 = vector.shape_cast %11 : vector<1x32x128xbf16> to vector<32x128xbf16>
    %13 = arith.extf %12 : vector<32x128xbf16> to vector<32x128xf32>
    %14 = vector.shape_cast %13 : vector<32x128xf32> to vector<4x8x128xf32>
    %cst_7 = arith.constant dense<0.000000e+00> : vector<8x128xf32>
    %15 = vector.multi_reduction <add>, %14, %cst_7 [0] : vector<4x8x128xf32> to vector<8x128xf32>
    %16 = arith.addf %3, %15 : vector<8x128xf32>
    %c0_8 = arith.constant 0 : index
    %c0_9 = arith.constant 0 : index
    %17 = arith.index_cast %9 : i32 to index
    %c0_10 = arith.constant 0 : index
    %18 = vector.load %arg3[%c0_8, %c0_9, %17, %c0_10] : memref<1x2x32x128xf32, #tpu.memory_space<vmem>>, vector<1x1x32x128xf32>
    %19 = vector.shape_cast %18 : vector<1x1x32x128xf32> to vector<32x128xf32>
    %cst_11 = arith.constant 0.000000e+00 : f32
    %20 = vector.broadcast %cst_11 : f32 to vector<32x128xf32>
    %21 = arith.maximumf %19, %20 : vector<32x128xf32>
    %22 = arith.mulf %19, %13 : vector<32x128xf32>
    %23 = arith.subf %21, %22 : vector<32x128xf32>
    %24 = math.absf %19 : vector<32x128xf32>
    %cst_12 = arith.constant 0.000000e+00 : f32
    %25 = vector.broadcast %cst_12 : f32 to vector<32x128xf32>
    %26 = arith.subf %25, %24 : vector<32x128xf32>
    %27 = math.exp %26 : vector<32x128xf32>
    %cst_13 = arith.constant 1.000000e+00 : f32
    %28 = vector.broadcast %cst_13 : f32 to vector<32x128xf32>
    %29 = arith.addf %28, %27 : vector<32x128xf32>
    %30 = math.log %29 : vector<32x128xf32>
    %31 = arith.addf %23, %30 : vector<32x128xf32>
    %32 = vector.shape_cast %31 : vector<32x128xf32> to vector<4x8x128xf32>
    %cst_14 = arith.constant dense<0.000000e+00> : vector<8x128xf32>
    %33 = vector.multi_reduction <add>, %32, %cst_14 [0] : vector<4x8x128xf32> to vector<8x128xf32>
    %34 = arith.addf %4, %33 : vector<8x128xf32>
    %35 = arith.mulf %13, %31 : vector<32x128xf32>
    %36 = vector.shape_cast %35 : vector<32x128xf32> to vector<4x8x128xf32>
    %cst_15 = arith.constant dense<0.000000e+00> : vector<8x128xf32>
    %37 = vector.multi_reduction <add>, %36, %cst_15 [0] : vector<4x8x128xf32> to vector<8x128xf32>
    %38 = arith.addf %5, %37 : vector<8x128xf32>
    %c0_16 = arith.constant 0 : index
    %c1 = arith.constant 1 : index
    %39 = arith.index_cast %9 : i32 to index
    %c0_17 = arith.constant 0 : index
    %40 = vector.load %arg3[%c0_16, %c1, %39, %c0_17] : memref<1x2x32x128xf32, #tpu.memory_space<vmem>>, vector<1x1x32x128xf32>
    %41 = vector.shape_cast %40 : vector<1x1x32x128xf32> to vector<32x128xf32>
    %cst_18 = arith.constant 0.000000e+00 : f32
    %42 = vector.broadcast %cst_18 : f32 to vector<32x128xf32>
    %43 = arith.maximumf %41, %42 : vector<32x128xf32>
    %44 = arith.mulf %41, %13 : vector<32x128xf32>
    %45 = arith.subf %43, %44 : vector<32x128xf32>
    %46 = math.absf %41 : vector<32x128xf32>
    %cst_19 = arith.constant 0.000000e+00 : f32
    %47 = vector.broadcast %cst_19 : f32 to vector<32x128xf32>
    %48 = arith.subf %47, %46 : vector<32x128xf32>
    %49 = math.exp %48 : vector<32x128xf32>
    %cst_20 = arith.constant 1.000000e+00 : f32
    %50 = vector.broadcast %cst_20 : f32 to vector<32x128xf32>
    %51 = arith.addf %50, %49 : vector<32x128xf32>
    %52 = math.log %51 : vector<32x128xf32>
    %53 = arith.addf %45, %52 : vector<32x128xf32>
    %54 = vector.shape_cast %53 : vector<32x128xf32> to vector<4x8x128xf32>
    %cst_21 = arith.constant dense<0.000000e+00> : vector<8x128xf32>
    %55 = vector.multi_reduction <add>, %54, %cst_21 [0] : vector<4x8x128xf32> to vector<8x128xf32>
    %56 = arith.addf %6, %55 : vector<8x128xf32>
    %57 = arith.mulf %13, %53 : vector<32x128xf32>
    %58 = vector.shape_cast %57 : vector<32x128xf32> to vector<4x8x128xf32>
    %cst_22 = arith.constant dense<0.000000e+00> : vector<8x128xf32>
    %59 = vector.multi_reduction <add>, %58, %cst_22 [0] : vector<4x8x128xf32> to vector<8x128xf32>
    %60 = arith.addf %7, %59 : vector<8x128xf32>
    %c1_i32 = arith.constant 1 : i32
    %c0_23 = arith.constant 0 : index
    %c0_24 = arith.constant 0 : index
    %c0_25 = arith.constant 0 : index
    %c0_26 = arith.constant 0 : index
    %c0_27 = arith.constant 0 : index
    %61 = vector.load %arg5[%c0_23, %c0_24, %c0_25, %c0_26, %c0_27] : memref<1x1x5x8x128xf32, #tpu.memory_space<vmem>>, vector<1x1x1x8x128xf32>
    %62 = vector.shape_cast %61 : vector<1x1x1x8x128xf32> to vector<8x128xf32>
    %63 = arith.addf %62, %16 : vector<8x128xf32>
    %c0_28 = arith.constant 0 : index
    %c0_29 = arith.constant 0 : index
    %c0_30 = arith.constant 0 : index
    %c0_31 = arith.constant 0 : index
    %c0_32 = arith.constant 0 : index
    %64 = vector.load %arg5[%c0_28, %c0_29, %c0_30, %c0_31, %c0_32] : memref<1x1x5x8x128xf32, #tpu.memory_space<vmem>>, vector<1x1x1x8x128xf32>
    %65 = vector.shape_cast %64 : vector<1x1x1x8x128xf32> to vector<8x128xf32>
    %66 = vector.shape_cast %63 : vector<8x128xf32> to vector<1x1x1x8x128xf32>
    tpu.vector_store %arg5[%c0_28, %c0_29, %c0_30, %c0_31, %c0_32], %66 {strides = array<i32>} : memref<1x1x5x8x128xf32, #tpu.memory_space<vmem>>, vector<1x1x1x8x128xf32>,
    %c0_33 = arith.constant 0 : index
    %c0_34 = arith.constant 0 : index
    %c1_35 = arith.constant 1 : index
    %c0_36 = arith.constant 0 : index
    %c0_37 = arith.constant 0 : index
    %67 = vector.load %arg5[%c0_33, %c0_34, %c1_35, %c0_36, %c0_37] : memref<1x1x5x8x128xf32, #tpu.memory_space<vmem>>, vector<1x1x1x8x128xf32>
    %68 = vector.shape_cast %67 : vector<1x1x1x8x128xf32> to vector<8x128xf32>
    %69 = arith.addf %68, %34 : vector<8x128xf32>
    %c0_38 = arith.constant 0 : index
    %c0_39 = arith.constant 0 : index
    %c1_40 = arith.constant 1 : index
    %c0_41 = arith.constant 0 : index
    %c0_42 = arith.constant 0 : index
    %70 = vector.load %arg5[%c0_38, %c0_39, %c1_40, %c0_41, %c0_42] : memref<1x1x5x8x128xf32, #tpu.memory_space<vmem>>, vector<1x1x1x8x128xf32>
    %71 = vector.shape_cast %70 : vector<1x1x1x8x128xf32> to vector<8x128xf32>
    %72 = vector.shape_cast %69 : vector<8x128xf32> to vector<1x1x1x8x128xf32>
    tpu.vector_store %arg5[%c0_38, %c0_39, %c1_40, %c0_41, %c0_42], %72 {strides = array<i32>} : memref<1x1x5x8x128xf32, #tpu.memory_space<vmem>>, vector<1x1x1x8x128xf32>,
    %c0_43 = arith.constant 0 : index
    %c0_44 = arith.constant 0 : index
    %c2 = arith.constant 2 : index
    %c0_45 = arith.constant 0 : index
    %c0_46 = arith.constant 0 : index
    %73 = vector.load %arg5[%c0_43, %c0_44, %c2, %c0_45, %c0_46] : memref<1x1x5x8x128xf32, #tpu.memory_space<vmem>>, vector<1x1x1x8x128xf32>
    %74 = vector.shape_cast %73 : vector<1x1x1x8x128xf32> to vector<8x128xf32>
    %75 = arith.addf %74, %38 : vector<8x128xf32>
    %c0_47 = arith.constant 0 : index
    %c0_48 = arith.constant 0 : index
    %c2_49 = arith.constant 2 : index
    %c0_50 = arith.constant 0 : index
    %c0_51 = arith.constant 0 : index
    %76 = vector.load %arg5[%c0_47, %c0_48, %c2_49, %c0_50, %c0_51] : memref<1x1x5x8x128xf32, #tpu.memory_space<vmem>>, vector<1x1x1x8x128xf32>
    %77 = vector.shape_cast %76 : vector<1x1x1x8x128xf32> to vector<8x128xf32>
    %78 = vector.shape_cast %75 : vector<8x128xf32> to vector<1x1x1x8x128xf32>
    tpu.vector_store %arg5[%c0_47, %c0_48, %c2_49, %c0_50, %c0_51], %78 {strides = array<i32>} : memref<1x1x5x8x128xf32, #tpu.memory_space<vmem>>, vector<1x1x1x8x128xf32>,
    %c0_52 = arith.constant 0 : index
    %c0_53 = arith.constant 0 : index
    %c3 = arith.constant 3 : index
    %c0_54 = arith.constant 0 : index
    %c0_55 = arith.constant 0 : index
    %79 = vector.load %arg5[%c0_52, %c0_53, %c3, %c0_54, %c0_55] : memref<1x1x5x8x128xf32, #tpu.memory_space<vmem>>, vector<1x1x1x8x128xf32>
    %80 = vector.shape_cast %79 : vector<1x1x1x8x128xf32> to vector<8x128xf32>
    %81 = arith.addf %80, %56 : vector<8x128xf32>
    %c0_56 = arith.constant 0 : index
    %c0_57 = arith.constant 0 : index
    %c3_58 = arith.constant 3 : index
    %c0_59 = arith.constant 0 : index
    %c0_60 = arith.constant 0 : index
    %82 = vector.load %arg5[%c0_56, %c0_57, %c3_58, %c0_59, %c0_60] : memref<1x1x5x8x128xf32, #tpu.memory_space<vmem>>, vector<1x1x1x8x128xf32>
    %83 = vector.shape_cast %82 : vector<1x1x1x8x128xf32> to vector<8x128xf32>
    %84 = vector.shape_cast %81 : vector<8x128xf32> to vector<1x1x1x8x128xf32>
    tpu.vector_store %arg5[%c0_56, %c0_57, %c3_58, %c0_59, %c0_60], %84 {strides = array<i32>} : memref<1x1x5x8x128xf32, #tpu.memory_space<vmem>>, vector<1x1x1x8x128xf32>,
    %c0_61 = arith.constant 0 : index
    %c0_62 = arith.constant 0 : index
    %c4 = arith.constant 4 : index
    %c0_63 = arith.constant 0 : index
    %c0_64 = arith.constant 0 : index
    %85 = vector.load %arg5[%c0_61, %c0_62, %c4, %c0_63, %c0_64] : memref<1x1x5x8x128xf32, #tpu.memory_space<vmem>>, vector<1x1x1x8x128xf32>
    %86 = vector.shape_cast %85 : vector<1x1x1x8x128xf32> to vector<8x128xf32>
    %87 = arith.addf %86, %60 : vector<8x128xf32>
    %c0_65 = arith.constant 0 : index
    %c0_66 = arith.constant 0 : index
    %c4_67 = arith.constant 4 : index
    %c0_68 = arith.constant 0 : index
    %c0_69 = arith.constant 0 : index
    %88 = vector.load %arg5[%c0_65, %c0_66, %c4_67, %c0_68, %c0_69] : memref<1x1x5x8x128xf32, #tpu.memory_space<vmem>>, vector<1x1x1x8x128xf32>
    %89 = vector.shape_cast %88 : vector<1x1x1x8x128xf32> to vector<8x128xf32>
    %90 = vector.shape_cast %87 : vector<8x128xf32> to vector<1x1x1x8x128xf32>
    tpu.vector_store %arg5[%c0_65, %c0_66, %c4_67, %c0_68, %c0_69], %90 {strides = array<i32>} : memref<1x1x5x8x128xf32, #tpu.memory_space<vmem>>, vector<1x1x1x8x128xf32>,
    return
  }
  func.func @transform_0(%arg0: i32, %arg1: i32, %arg2: i32) -> (i32, i32, i32, i32) {
    %c1_i32 = arith.constant 1 : i32
    %0 = arith.muli %arg0, %c1_i32 : i32
    %1 = arith.addi %0, %arg2 : i32
    %c0_i32 = arith.constant 0 : i32
    %c0_i32_0 = arith.constant 0 : i32
    %c0_i32_1 = arith.constant 0 : i32
    return %arg1, %c0_i32, %1, %c0_i32_0 : i32, i32, i32, i32
  }
  func.func @transform_1(%arg0: i32, %arg1: i32, %arg2: i32) -> (i32, i32, i32) {
    %c1_i32 = arith.constant 1 : i32
    %0 = arith.muli %arg0, %c1_i32 : i32
    %1 = arith.addi %0, %arg2 : i32
    %c0_i32 = arith.constant 0 : i32
    %c0_i32_0 = arith.constant 0 : i32
    return %arg1, %1, %c0_i32 : i32, i32, i32
  }
  func.func @transform_2(%arg0: i32, %arg1: i32, %arg2: i32) -> (i32, i32, i32, i32, i32) {
    %c0_i32 = arith.constant 0 : i32
    %c0_i32_0 = arith.constant 0 : i32
    %c0_i32_1 = arith.constant 0 : i32
    %c0_i32_2 = arith.constant 0 : i32
    return %arg0, %arg1, %c0_i32, %c0_i32_0, %c0_i32_1 : i32, i32, i32, i32, i32
  }
}

</mosaic_0001>

<llo_original>
// kernel: tpu_custom_call.1
$region0: #{tpu_custom_call.1}
  #allocation0 [shape = 'u32[]', space=smem, size = 0x4, offset = 0x4, fixed_abs, tag = 'smem constant byte address 0x4 - core index']
  #allocation1 [shape = 'u32[144,128]{1,0:T(1,128)}', space=vmem, size = 0x12000, scoped, tag = 'internal scratch']
  %s0 = inlined_call_operand.hbm [shape: f32[2,2,32,128], index: 0, kind: input, shape index: {}]
  %s1 = inlined_call_operand.hbm [shape: bf16[2,32,128], index: 1, kind: input, shape index: {}]
  %s2 = inlined_call_operand.hbm [shape: f32[1,2,5,8,128], index: 2, kind: output, shape index: {}]
  %s3 = sld [smem:[#allocation0]]
  $region53: #{tpu_custom_call.1} parent=0
    _
  %s5 = ssub.s32 1, %s3
  %s6 = scalar_select 0, %s5, %s3
  $region1: #{tpu_custom_call.1} parent=0
    #allocation2 [shape = 'u8[65536]{0}', space=vmem, size = 0x10000, scoped, tag = 'input window, operand 0']
    #allocation3 [shape = 's32[2]{0}', space=sflag, size = 0x8, scoped, tag = 'scoped memory for tpu_custom_call.1']
    #allocation4 [shape = 's32[2]{0}', space=sflag, size = 0x8, scoped, tag = 'scoped memory for tpu_custom_call.1']
    #allocation5 [shape = 'u8[16384]{0}', space=vmem, size = 0x4000, scoped, tag = 'input window, operand 1']
    #allocation6 [shape = 's32[2]{0}', space=sflag, size = 0x8, scoped, tag = 'scoped memory for tpu_custom_call.1']
    #allocation7 [shape = 'u8[40960]{0}', space=vmem, size = 0xa000, scoped, tag = 'output window, operand 0']
    %7 = vsyncpa [#allocation3], 0
    %s8 = scalar_lea.sflag [#allocation3], 1
    %9 = vsyncpa %s8, 0
    %10 = vsyncpa [#allocation6], 0
    %s11 = scalar_lea.sflag [#allocation6], 1
    %12 = vsyncpa %s11, 0
    %13 = vsyncpa [#allocation4], 0
    %s14 = scalar_lea.sflag [#allocation4], 1
    %15 = vsyncpa %s14, 0
    loop: start=0, step=1, limit=4
    $region2: #{tpu_custom_call.1} parent=1 // loop_pre_header
      _
    $region3: #{tpu_custom_call.1} parent=1 // loop_header
      %s17 = sphi 0, %s21
      %p18 = scmp.ge.s32.totalorder %s17, 4
      %s24 = sphi 0, %s43
      %s25 = sphi 0, %s39
      %s26 = sphi 0, %s35
      %s27 = sphi 0, %s24
      %s28 = sphi 0, %s25
      %s29 = sphi 0, %s26
      %s30 = sphi 0, %s27
      %s31 = sphi 0, %s28
      %s32 = sphi 0, %s29
      %s50 = sphi 0, %s52
      %s53 = sphi 0, %s50
      %s54 = sphi 0, %s53
      %s70 = sphi 0, %s54
      %s80 = sphi 0, %s82
      %s83 = sphi 0, %s80
      %s84 = sphi 0, %s83
      %s100 = sphi 0, %s84
      %s108 = sphi 0, %s110
      %s111 = sphi 0, %s108
      %s112 = sphi 0, %s111
      %s128 = sphi 0, %s112
    $region4: #{tpu_custom_call.1} parent=1 // loop_header_branch
      %20 = sbr.rel (%p18) target = $region8
    $region5: #{tpu_custom_call.1} parent=1 // loop_body
      %s22 = ssub.s32 %s17, 1
      %s23 = ssub.s32 %s17, 2
      %s33 = sadd.s32 1, %s26
      %p34 = scmp.ge.s32.totalorder %s33, 1
      %s35 = scalar_select %p34, 0, %s33
      %s36 = sadd.s32 1, %s25
      %s37 = scalar_select %p34, %s36, %s25
      %p38 = scmp.ge.s32.totalorder %s37, 2
      %s39 = scalar_select %p38, 0, %s37
      %s40 = sadd.s32 1, %s24
      %s41 = scalar_select %p38, %s40, %s24
      %p42 = scmp.ge.s32.totalorder %s41, 1
      %s43 = scalar_select %p42, 0, %s41
      %s44 = sadd.s32 %s24, %s26
      %s45 = sadd.s32 %s43, %s35
      %s46 = ssub.s32 %s25, %s39
      %s47 = ssub.s32 %s44, %s45
      %s48 = sor.u32 %s46, %s47
      %p49 = scmp.eq.s32.totalorder %s48, 0
      %s51 = sadd.s32 %s50, 1
      %s52 = scalar_select %p49, %s50, %s51
      %p55 = pneg %p49
      %p56 = scmp.eq.s32.totalorder %s17, 1
      %p57 = por %p55, %p56
      %p58 = scmp.ne.s32.totalorder %s50, %s53
      %p59 = scmp.eq.s32.totalorder %s17, 0
      %p60 = por %p58, %p59
      %p61 = scmp.ne.s32.totalorder %s50, %s53
      %p62 = scmp.eq.s32.totalorder %s22, 1
      %p63 = por %p61, %p62
      %p64 = scmp.ne.s32.totalorder %s53, %s54
      %p65 = scmp.eq.s32.totalorder %s22, 0
      %p66 = por %p64, %p65
      %p67 = scmp.ne.s32.totalorder %s53, %s54
      %p68 = scmp.eq.s32.totalorder %s23, 1
      %p69 = por %p67, %p68
      %p71 = scmp.ne.s32.totalorder %s54, %s70
      %p72 = scmp.eq.s32.totalorder %s23, 0
      %p73 = por %p71, %p72
      %s74 = sadd.s32 %s24, %s26
      %s75 = sadd.s32 %s43, %s35
      %s76 = ssub.s32 %s25, %s39
      %s77 = ssub.s32 %s74, %s75
      %s78 = sor.u32 %s76, %s77
      %p79 = scmp.eq.s32.totalorder %s78, 0
      %s81 = sadd.s32 %s80, 1
      %s82 = scalar_select %p79, %s80, %s81
      %p85 = pneg %p79
      %p86 = scmp.eq.s32.totalorder %s17, 1
      %p87 = por %p85, %p86
      %p88 = scmp.ne.s32.totalorder %s80, %s83
      %p89 = scmp.eq.s32.totalorder %s17, 0
      %p90 = por %p88, %p89
      %p91 = scmp.ne.s32.totalorder %s80, %s83
      %p92 = scmp.eq.s32.totalorder %s22, 1
      %p93 = por %p91, %p92
      %p94 = scmp.ne.s32.totalorder %s83, %s84
      %p95 = scmp.eq.s32.totalorder %s22, 0
      %p96 = por %p94, %p95
      %p97 = scmp.ne.s32.totalorder %s83, %s84
      %p98 = scmp.eq.s32.totalorder %s23, 1
      %p99 = por %p97, %p98
      %p101 = scmp.ne.s32.totalorder %s84, %s100
      %p102 = scmp.eq.s32.totalorder %s23, 0
      %p103 = por %p101, %p102
      %s104 = ssub.s32 %s24, %s43
      %s105 = ssub.s32 %s25, %s39
      %s106 = sor.u32 %s104, %s105
      %p107 = scmp.eq.s32.totalorder %s106, 0
      %s109 = sadd.s32 %s108, 1
      %s110 = scalar_select %p107, %s108, %s109
      %p113 = pneg %p107
      %p114 = scmp.eq.s32.totalorder %s17, 1
      %p115 = por %p113, %p114
      %p116 = scmp.ne.s32.totalorder %s108, %s111
      %p117 = scmp.eq.s32.totalorder %s17, 0
      %p118 = por %p116, %p117
      %p119 = scmp.ne.s32.totalorder %s108, %s111
      %p120 = scmp.eq.s32.totalorder %s22, 1
      %p121 = por %p119, %p120
      %p122 = scmp.ne.s32.totalorder %s111, %s112
      %p123 = scmp.eq.s32.totalorder %s22, 0
      %p124 = por %p122, %p123
      %p125 = scmp.ne.s32.totalorder %s111, %s112
      %p126 = scmp.eq.s32.totalorder %s23, 1
      %p127 = por %p125, %p126
      %p129 = scmp.ne.s32.totalorder %s112, %s128
      %p130 = scmp.eq.s32.totalorder %s23, 0
      %p131 = por %p129, %p130
      %p132 = scmp.le.s32.totalorder 1, %s17
      %p133 = scmp.lt.s32.totalorder %s17, 3
      %p134 = pnand %p132, %p133
      %p135 = pneg %p134
      // Predicated region
      $region9: #{tpu_custom_call.1} parent=5 // pred_check
        _
      $region10: #{tpu_custom_call.1} parent=5 // pred_check_branch
        %137 = sbr.rel (%p134) target = $region12
      $region11: #{tpu_custom_call.1} parent=5 // pred_region
        %s138 = ssub.s32 %s17, 1
      $region12: #{tpu_custom_call.1} parent=5 // pred_fallthru
        _
      %p139 = scmp.lt.s32.totalorder %s17, 2
      // Predicated region
      $region13: #{tpu_custom_call.1} parent=5 // pred_check
        %p140 = pneg %p139
      $region14: #{tpu_custom_call.1} parent=5 // pred_check_branch
        %142 = sbr.rel (%p140) target = $region16
      $region15: #{tpu_custom_call.1} parent=5 // pred_region
        // Predicated region
        $region17: #{tpu_custom_call.1} parent=15 // pred_check
          %p143 = pneg %p60
        $region18: #{tpu_custom_call.1} parent=15 // pred_check_branch
          %145 = sbr.rel (%p143) target = $region20
        $region19: #{tpu_custom_call.1} parent=15 // pred_region
          %s146 = sand.u32 %s50, 1
          %s147 = scalar_lea.sflag [#allocation3], %s146
          %s148 = sand.u32 %s50, 1
          %s149 = smul.addr %s148, 64
          %s150 = scalar_lea.vmem [#allocation2], %s149
          %s151 = sadd.s32 %s24, %s26
          %s152 = smul.u32 4, %s151
          %s154 = ssub.s32 1024, 1024
          %155 = vsyncadd %s147, %s154
          %s156 = smul.addr %s25, 8
          %s157 = sadd.s32 %s152, %s156
          %s158 = smul.addr %s157, 128
          %s159 = scalar_lea.hbm %s0, %s158
          %s160 = sshll.u32 %s150, 4
          %s161 = int_to_ptr.vmem [resolvable:$true] %s160
          %166 = dma.hbm_to_vmem [thread:$0]  %s159, 1024, %s161, %s147, 128, 128, 8
        $region20: #{tpu_custom_call.1} parent=15 // pred_fallthru
          _
        // Predicated region
        $region21: #{tpu_custom_call.1} parent=15 // pred_check
          %p167 = pneg %p90
        $region22: #{tpu_custom_call.1} parent=15 // pred_check_branch
          %169 = sbr.rel (%p167) target = $region24
        $region23: #{tpu_custom_call.1} parent=15 // pred_region
          %s170 = sand.u32 %s80, 1
          %s171 = scalar_lea.sflag [#allocation6], %s170
          %s172 = sand.u32 %s80, 1
          %s173 = smul.addr %s172, 16
          %s174 = scalar_lea.vmem [#allocation5], %s173
          %s175 = sadd.s32 %s24, %s26
          %s176 = smul.u32 4, %s175
          %s178 = ssub.s32 256, 256
          %179 = vsyncadd %s171, %s178
          %s180 = smul.addr %s25, 4
          %s181 = sadd.s32 %s176, %s180
          %s182 = smul.addr %s181, 64
          %s183 = scalar_lea.hbm %s1, %s182
          %s184 = sshll.u32 %s174, 4
          %s185 = int_to_ptr.vmem [resolvable:$true] %s184
          %190 = dma.hbm_to_vmem [thread:$0]  %s183, 256, %s185, %s171, 64, 64, 4
        $region24: #{tpu_custom_call.1} parent=15 // pred_fallthru
          _
      $region16: #{tpu_custom_call.1} parent=5 // pred_fallthru
        _
      %p191 = scmp.le.s32.totalorder 1, %s17
      %p192 = scmp.lt.s32.totalorder %s17, 3
      %p193 = pnand %p191, %p192
      %p194 = pneg %p193
      // Predicated region
      $region25: #{tpu_custom_call.1} parent=5 // pred_check
        _
      $region26: #{tpu_custom_call.1} parent=5 // pred_check_branch
        %196 = sbr.rel (%p193) target = $region28
      $region27: #{tpu_custom_call.1} parent=5 // pred_region
        %s197 = ssub.s32 %s17, 1
        %s198 = sand.u32 %s53, 1
        %s199 = scalar_lea.sflag [#allocation3], %s198
        %s200 = sand.u32 %s53, 1
        %s201 = smul.addr %s200, 64
        %s202 = scalar_lea.vmem [#allocation2], %s201
        // Predicated region
        $region29: #{tpu_custom_call.1} parent=27 // pred_check
          %p203 = pneg %p66
        $region30: #{tpu_custom_call.1} parent=27 // pred_check_branch
          %205 = sbr.rel (%p203) target = $region32
        $region31: #{tpu_custom_call.1} parent=27 // pred_region
          %206 = dma.done %s199, 1024
        $region32: #{tpu_custom_call.1} parent=27 // pred_fallthru
          _
        %s207 = sand.u32 %s83, 1
        %s208 = scalar_lea.sflag [#allocation6], %s207
        %s209 = sand.u32 %s83, 1
        %s210 = smul.addr %s209, 16
        %s211 = scalar_lea.vmem [#allocation5], %s210
        // Predicated region
        $region33: #{tpu_custom_call.1} parent=27 // pred_check
          %p212 = pneg %p96
        $region34: #{tpu_custom_call.1} parent=27 // pred_check_branch
          %214 = sbr.rel (%p212) target = $region36
        $region35: #{tpu_custom_call.1} parent=27 // pred_region
          %215 = dma.done %s208, 256
        $region36: #{tpu_custom_call.1} parent=27 // pred_fallthru
          _
        %s216 = sand.u32 %s53, 1
        %s217 = scalar_lea.sflag [#allocation3], %s216
        %s218 = sand.u32 %s53, 1
        %s219 = smul.addr %s218, 64
        %s220 = scalar_lea.vmem [#allocation2], %s219
        %p221 = pneg %p66
        %p222 = pneg %p63
        %s223 = sand.u32 %s83, 1
        %s224 = scalar_lea.sflag [#allocation6], %s223
        %s225 = sand.u32 %s83, 1
        %s226 = smul.addr %s225, 16
        %s227 = scalar_lea.vmem [#allocation5], %s226
        %p228 = pneg %p96
        %p229 = pneg %p93
        %p230 = pneg %p124
        %p231 = pneg %p121
        %s232 = sand.u32 %s111, 1
        %s233 = scalar_lea.sflag [#allocation4], %s232
        %s234 = sand.u32 %s111, 1
        %s235 = smul.addr %s234, 40
        %s236 = scalar_lea.vmem [#allocation7], %s235
        %s237 = sadd.s32 %s27, %s29
        %s238 = smul.u32 4, %s237
        %s239 = sadd.s32 %s27, %s29
        %s240 = smul.u32 4, %s239
        %p241 = scmp.eq.s32.totalorder %s29, 0
        // Predicated region
        $region37: #{tpu_custom_call.1} parent=27 // pred_check
          %p242 = pneg %p241
        $region38: #{tpu_custom_call.1} parent=27 // pred_check_branch
          %244 = sbr.rel (%p242) target = $region40
        $region39: #{tpu_custom_call.1} parent=27 // pred_region
          %245 = vst [vmem:[%s236] sm:$0xff] 0.0
          %246 = vst [vmem:[%s236 + $0x8] sm:$0xff] 0.0
          %247 = vst [vmem:[%s236 + $0x10] sm:$0xff] 0.0
          %248 = vst [vmem:[%s236 + $0x18] sm:$0xff] 0.0
          %249 = vst [vmem:[%s236 + $0x20] sm:$0xff] 0.0
        $region40: #{tpu_custom_call.1} parent=27 // pred_fallthru
          _
        %v250 = vld [vmem:[%s211] sm:$0xf]
        %v251 = vld [vmem:[%s211 + $0x4] sm:$0xf]
        %v252 = vld [vmem:[%s211 + $0x8] sm:$0xf]
        %v253 = vld [vmem:[%s211 + $0xc] sm:$0xf]
        %v254 = vunpack.c.l.bf16 %v250
        %v255 = vunpack.c.l.bf16 %v251
        %v256 = vunpack.c.l.bf16 %v252
        %v257 = vunpack.c.l.bf16 %v253
        %v258 = vadd.f32 %v254, %v255
        %v259 = vadd.f32 %v258, %v256
        %v260 = vadd.f32 %v259, %v257
        %v261 = vadd.f32 %v260, 0.0
        %v262 = vld [vmem:[%s202] sm:$0xff]
        %v263 = vld [vmem:[%s202 + $0x8] sm:$0xff]
        %v264 = vld [vmem:[%s202 + $0x10] sm:$0xff]
        %v265 = vld [vmem:[%s202 + $0x18] sm:$0xff]
        %v266 = vmax.f32 %v262, 0.0
        %v267 = vmax.f32 %v263, 0.0
        %v268 = vmax.f32 %v264, 0.0
        %v269 = vmax.f32 %v265, 0.0
        %v270 = vmul.f32 %v262, %v254
        %v271 = vmul.f32 %v263, %v255
        %v272 = vmul.f32 %v264, %v256
        %v273 = vmul.f32 %v265, %v257
        %v274 = vsub.f32 %v266, %v270
        %v275 = vsub.f32 %v267, %v271
        %v276 = vsub.f32 %v268, %v272
        %v277 = vsub.f32 %v269, %v273
        %v278 = vand.u32 2147483647, %v262
        %v279 = vand.u32 2147483647, %v263
        %v280 = vand.u32 2147483647, %v264
        %v281 = vand.u32 2147483647, %v265
        %v282 = vsub.f32 0.0, %v278
        %v283 = vsub.f32 0.0, %v279
        %v284 = vsub.f32 0.0, %v280
        %v285 = vsub.f32 0.0, %v281
        %v286 = vmul.f32 %v282, 1.442695
        %v287 = vpow.pop %v286
        %v288 = vmul.f32 %v283, 1.442695
        %v289 = vpow.pop %v288
        %v290 = vmul.f32 %v284, 1.442695
        %v291 = vpow.pop %v290
        %v292 = vmul.f32 %v285, 1.442695
        %v293 = vpow.pop %v292
        %v294 = vadd.f32 %v287, 1.0
        %v295 = vadd.f32 %v289, 1.0
        %v296 = vadd.f32 %v291, 1.0
        %v297 = vadd.f32 %v293, 1.0
        %v298 = vlog2.pop %v294
        %v299 = vmul.f32 %v298, 0.6931472
        %v300 = vlog2.pop %v295
        %v301 = vmul.f32 %v300, 0.6931472
        %v302 = vlog2.pop %v296
        %v303 = vmul.f32 %v302, 0.6931472
        %v304 = vlog2.pop %v297
        %v305 = vmul.f32 %v304, 0.6931472
        %v306 = vadd.f32 %v274, %v299
        %v307 = vadd.f32 %v275, %v301
        %v308 = vadd.f32 %v276, %v303
        %v309 = vadd.f32 %v277, %v305
        %v310 = vadd.f32 %v306, %v307
        %v311 = vadd.f32 %v310, %v308
        %v312 = vadd.f32 %v311, %v309
        %v313 = vadd.f32 %v312, 0.0
        %v314 = vmul.f32 %v254, %v306
        %v315 = vmul.f32 %v255, %v307
        %v316 = vmul.f32 %v256, %v308
        %v317 = vmul.f32 %v257, %v309
        %v318 = vadd.f32 %v314, %v315
        %v319 = vadd.f32 %v318, %v316
        %v320 = vadd.f32 %v319, %v317
        %v321 = vadd.f32 %v320, 0.0
        %s322 = sadd.s32 0, 32
        %s323 = scalar_lea.vmem %s202, %s322 [#allocation2]
        %v324 = vld [vmem:[%s323] sm:$0xff]
        %v325 = vld [vmem:[%s323 + $0x8] sm:$0xff]
        %v326 = vld [vmem:[%s323 + $0x10] sm:$0xff]
        %v327 = vld [vmem:[%s323 + $0x18] sm:$0xff]
        %v328 = vmax.f32 %v324, 0.0
        %v329 = vmax.f32 %v325, 0.0
        %v330 = vmax.f32 %v326, 0.0
        %v331 = vmax.f32 %v327, 0.0
        %v332 = vmul.f32 %v324, %v254
        %v333 = vmul.f32 %v325, %v255
        %v334 = vmul.f32 %v326, %v256
        %v335 = vmul.f32 %v327, %v257
        %v336 = vsub.f32 %v328, %v332
        %v337 = vsub.f32 %v329, %v333
        %v338 = vsub.f32 %v330, %v334
        %v339 = vsub.f32 %v331, %v335
        %v340 = vand.u32 2147483647, %v324
        %v341 = vand.u32 2147483647, %v325
        %v342 = vand.u32 2147483647, %v326
        %v343 = vand.u32 2147483647, %v327
        %v344 = vsub.f32 0.0, %v340
        %v345 = vsub.f32 0.0, %v341
        %v346 = vsub.f32 0.0, %v342
        %v347 = vsub.f32 0.0, %v343
        %v348 = vmul.f32 %v344, 1.442695
        %v349 = vpow.pop %v348
        %v350 = vmul.f32 %v345, 1.442695
        %v351 = vpow.pop %v350
        %v352 = vmul.f32 %v346, 1.442695
        %v353 = vpow.pop %v352
        %v354 = vmul.f32 %v347, 1.442695
        %v355 = vpow.pop %v354
        %v356 = vadd.f32 %v349, 1.0
        %v357 = vadd.f32 %v351, 1.0
        %v358 = vadd.f32 %v353, 1.0
        %v359 = vadd.f32 %v355, 1.0
        %v360 = vlog2.pop %v356
        %v361 = vmul.f32 %v360, 0.6931472
        %v362 = vlog2.pop %v357
        %v363 = vmul.f32 %v362, 0.6931472
        %v364 = vlog2.pop %v358
        %v365 = vmul.f32 %v364, 0.6931472
        %v366 = vlog2.pop %v359
        %v367 = vmul.f32 %v366, 0.6931472
        %v368 = vadd.f32 %v336, %v361
        %v369 = vadd.f32 %v337, %v363
        %v370 = vadd.f32 %v338, %v365
        %v371 = vadd.f32 %v339, %v367
        %v372 = vadd.f32 %v368, %v369
        %v373 = vadd.f32 %v372, %v370
        %v374 = vadd.f32 %v373, %v371
        %v375 = vadd.f32 %v374, 0.0
        %v376 = vmul.f32 %v254, %v368
        %v377 = vmul.f32 %v255, %v369
        %v378 = vmul.f32 %v256, %v370
        %v379 = vmul.f32 %v257, %v371
        %v380 = vadd.f32 %v376, %v377
        %v381 = vadd.f32 %v380, %v378
        %v382 = vadd.f32 %v381, %v379
        %v383 = vadd.f32 %v382, 0.0
        %v384 = vld [vmem:[%s236] sm:$0xff]
        %v385 = vadd.f32 %v384, %v261
        %386 = vst [vmem:[%s236] sm:$0xff] %v385
        %s387 = scalar_lea.vmem %s236, 8 [#allocation7]
        %v388 = vld [vmem:[%s387] sm:$0xff]
        %v389 = vadd.f32 %v388, %v313
        %390 = vst [vmem:[%s387] sm:$0xff] %v389
        %s391 = scalar_lea.vmem %s236, 16 [#allocation7]
        %v392 = vld [vmem:[%s391] sm:$0xff]
        %v393 = vadd.f32 %v392, %v321
        %394 = vst [vmem:[%s391] sm:$0xff] %v393
        %s395 = scalar_lea.vmem %s236, 24 [#allocation7]
        %v396 = vld [vmem:[%s395] sm:$0xff]
        %v397 = vadd.f32 %v396, %v375
        %398 = vst [vmem:[%s395] sm:$0xff] %v397
        %s399 = scalar_lea.vmem %s236, 32 [#allocation7]
        %v400 = vld [vmem:[%s399] sm:$0xff]
        %v401 = vadd.f32 %v400, %v383
        %402 = vst [vmem:[%s399] sm:$0xff] %v401
        %s403 = sand.u32 %s111, 1
        %s404 = scalar_lea.sflag [#allocation4], %s403
        %s405 = sand.u32 %s111, 1
        %s406 = smul.addr %s405, 40
        %s407 = scalar_lea.vmem [#allocation7], %s406
        // Predicated region
        $region41: #{tpu_custom_call.1} parent=27 // pred_check
          %p408 = pneg %p121
        $region42: #{tpu_custom_call.1} parent=27 // pred_check_branch
          %410 = sbr.rel (%p408) target = $region44
        $region43: #{tpu_custom_call.1} parent=27 // pred_region
          %s412 = ssub.s32 640, 640
          %413 = vsyncadd %s404, %s412
          %s414 = smul.addr %s28, 5
          %s415 = smul.addr %s27, 10
          %s416 = sadd.s32 %s414, %s415
          %s417 = smul.addr %s416, 128
          %s418 = scalar_lea.hbm %s2, %s417
          %s419 = sshll.u32 %s407, 4
          %s420 = int_to_ptr.vmem [resolvable:$true] %s419
          %425 = dma.vmem_to_hbm [thread:$0]  %s420, 640, %s418, %s404, 128, 128, 8
        $region44: #{tpu_custom_call.1} parent=27 // pred_fallthru
          _
      $region28: #{tpu_custom_call.1} parent=5 // pred_fallthru
        _
      %p426 = scmp.le.s32.totalorder 2, %s17
      // Predicated region
      $region45: #{tpu_custom_call.1} parent=5 // pred_check
        %p427 = pneg %p426
      $region46: #{tpu_custom_call.1} parent=5 // pred_check_branch
        %429 = sbr.rel (%p427) target = $region48
      $region47: #{tpu_custom_call.1} parent=5 // pred_region
        %s430 = ssub.s32 %s17, 2
        // Predicated region
        $region49: #{tpu_custom_call.1} parent=47 // pred_check
          %p431 = pneg %p127
        $region50: #{tpu_custom_call.1} parent=47 // pred_check_branch
          %433 = sbr.rel (%p431) target = $region52
        $region51: #{tpu_custom_call.1} parent=47 // pred_region
          %s434 = sand.u32 %s112, 1
          %s435 = scalar_lea.sflag [#allocation4], %s434
          %s436 = sand.u32 %s112, 1
          %s437 = smul.addr %s436, 40
          %s438 = scalar_lea.vmem [#allocation7], %s437
          %439 = dma.done %s435, 640
        $region52: #{tpu_custom_call.1} parent=47 // pred_fallthru
          _
      $region48: #{tpu_custom_call.1} parent=5 // pred_fallthru
        _
    $region6: #{tpu_custom_call.1} parent=1 // loop_footer
      %s21 = sadd.s32 1, %s17
    $region7: #{tpu_custom_call.1} parent=1 // loop_footer_branch
      %16 = sbr.rel target = $region3
    $region8: #{tpu_custom_call.1} parent=1 // loop_exit
      _
    %440 = vsyncpa [#allocation3], 1
    %s441 = scalar_lea.sflag [#allocation3], 1
    %442 = vsyncpa %s441, 1
    %443 = vsyncpa [#allocation6], 1
    %s444 = scalar_lea.sflag [#allocation6], 1
    %445 = vsyncpa %s444, 1
    %446 = vsyncpa [#allocation4], 1
    %s447 = scalar_lea.sflag [#allocation4], 1
    %448 = vsyncpa %s447, 1

</llo_original>
